<compile_context>
chip_gen: v7x
topology: tpu7x:2x2x1
jax: 0.10.0
libtpu: 0.0.40
codegen_flags: <defaults>
</compile_context>

<pallas_src>
import numpy as np
import jax
import jax.numpy as jnp
from jax.experimental import pallas as pl
from jax.experimental.pallas import tpu as pltpu


def _round_up(x, m):
    return (x + m - 1) // m * m


def _patch_embed_kernel(x_ref, w_ref, pos_ref, o_ref):
    # (TM, K_pad) @ (K_pad, D) on the MXU with f32 accumulation; add the
    # (class-fused) position rows in f32; one cast on the lane-dense store.
    acc = jnp.dot(x_ref[...], w_ref[...], preferred_element_type=jnp.float32)
    o_ref[...] = (acc + pos_ref[...].astype(jnp.float32)).astype(o_ref.dtype)


def clip_vision_embeddings(pixel_values, conv_weight, class_embedding,
                           position_embedding, *, patch_size,
                           out_dtype=jnp.float32,
                           vmem_row_budget_bytes=24 * 1024 * 1024):
    """Pallas implementation of CLIPVisionEmbeddings.forward.

    pixel_values:        (B, C, H, W)
    conv_weight:         (D, C, p, p)   (nn.Conv2d weight, bias=False)
    class_embedding:     (D,)
    position_embedding:  (num_positions, D) = (num_patches + 1, D)
    returns:             (B, num_positions, D)
    """
    B, C, H, W = pixel_values.shape
    D = conv_weight.shape[0]
    p = patch_size
    if H % p != 0 or W % p != 0:
        raise ValueError("image size must be a multiple of patch_size")
    gh, gw = H // p, W // p
    num_patches = gh * gw
    R = num_patches + 1                      # cls token + patches
    assert position_embedding.shape == (R, D), position_embedding.shape

    K = C * p * p
    K_pad = _round_up(K, 128)                # aligned contraction dim

    out_bytes = np.dtype(out_dtype).itemsize
    pos_dtype = jnp.bfloat16 if out_dtype == jnp.bfloat16 else jnp.float32
    pos_bytes = np.dtype(pos_dtype).itemsize

    # ---- row-tile selection (VMEM-budget aware) -----------------------------
    # Double-buffered X tile + out tile + pos tile bytes per row.
    per_row = 2 * (K_pad * 2 + D * out_bytes + D * pos_bytes)
    max_rows = max(16, vmem_row_budget_bytes // per_row)
    if R <= max_rows:
        # Whole image (incl. cls row) in one tile: no row padding, no final
        # slice, pos/W fully resident.  Covers all realistic CLIP configs.
        TM, n_m = R, 1
    else:
        TM = min(512, max(16, (max_rows // 16) * 16))   # 16-aligned bf16 tiles
        n_m = -(-R // TM)
    R_pad = TM * n_m

    # ---- operand prep (single fused materialization each) -------------------
    # im2col is a pure layout pass: (B,C,H,W) -> (B, num_patches, C*p*p) with
    # the K axis ordered (c, ph, pw) to match conv_weight.reshape(D, C*p*p).
    x = pixel_values.reshape(B, C, gh, p, gw, p)
    x = x.transpose(0, 2, 4, 1, 3, 5).reshape(B, num_patches, K)
    # bf16 cast + leading zero cls row + row/K zero padding in one pad op.
    x_cols = jnp.pad(x.astype(jnp.bfloat16),
                     ((0, 0), (1, R_pad - num_patches - 1), (0, K_pad - K)))

    w = jnp.pad(conv_weight.reshape(D, K).T.astype(jnp.bfloat16),
                ((0, K_pad - K), (0, 0)))                         # (K_pad, D)

    # Position table with the class token folded into row 0.
    pos = jnp.concatenate(
        [(class_embedding + position_embedding[0])[None, :],
         position_embedding[1:]], axis=0).astype(pos_dtype)       # (R, D)
    if R_pad > R:
        pos = jnp.pad(pos, ((0, R_pad - R), (0, 0)))

    # ---- grid / specs --------------------------------------------------------
    if n_m == 1:
        grid = (B,)
        x_spec = pl.BlockSpec((None, R_pad, K_pad), lambda b: (b, 0, 0))
        w_spec = pl.BlockSpec((K_pad, D), lambda b: (0, 0))       # resident
        pos_spec = pl.BlockSpec((R_pad, D), lambda b: (0, 0))     # resident
        out_spec = pl.BlockSpec((None, R_pad, D), lambda b: (b, 0, 0))
        dims = ("parallel",)
    else:
        # Row-tile-major grid so the pos / W block indices only change once
        # per row tile; Pallas skips re-fetch when the block index repeats.
        grid = (n_m, B)
        x_spec = pl.BlockSpec((None, TM, K_pad), lambda j, b: (b, j, 0))
        w_spec = pl.BlockSpec((K_pad, D), lambda j, b: (0, 0))
        pos_spec = pl.BlockSpec((TM, D), lambda j, b: (j, 0))
        out_spec = pl.BlockSpec((None, TM, D), lambda j, b: (b, j, 0))
        dims = ("parallel", "parallel")

    vmem_need = (2 * TM * K_pad * 2            # X tile (bf16, double buffered)
                 + 2 * TM * D * out_bytes      # out tile
                 + 2 * K_pad * D * 2           # W (bf16)
                 + 2 * TM * D * pos_bytes)     # pos tile
    vmem_limit = int(min(max(32 * 1024 * 1024, 2 * vmem_need),
                         64 * 1024 * 1024))

    cost = pl.CostEstimate(
        flops=2 * B * R_pad * K_pad * D,
        transcendentals=0,
        bytes_accessed=int(x_cols.size * 2 + w.size * 2
                           + pos.size * pos_bytes + B * R_pad * D * out_bytes))

    out = pl.pallas_call(
        _patch_embed_kernel,
        out_shape=jax.ShapeDtypeStruct((B, R_pad, D), out_dtype),
        grid_spec=pltpu.PrefetchScalarGridSpec(
            num_scalar_prefetch=0,
            grid=grid,
            in_specs=[x_spec, w_spec, pos_spec],
            out_specs=out_spec),
        compiler_params=pltpu.CompilerParams(
            dimension_semantics=dims,
            vmem_limit_bytes=vmem_limit),
        cost_estimate=cost,
    )(x_cols, w, pos)

    if R_pad > R:
        # Only reached for very large images that need multiple row tiles.
        out = out[:, :R]
    return out


if __name__ == "__main__":
    key = jax.random.PRNGKey(0)
    k1, k2, k3, k4 = jax.random.split(key, 4)

    # Small CLIP-like config: B=2, C=3, 32x32 image, patch 8 -> 16 patches,
    # 17 positions, hidden 128.
    B, C, image_size, patch_size, D = 2, 3, 32, 8, 128
    num_patches = (image_size // patch_size) ** 2
    num_positions = num_patches + 1

    pixel_values = jax.random.normal(k1, (B, C, image_size, image_size),
                                     jnp.float32)
    conv_weight = jax.random.normal(
        k2, (D, C, patch_size, patch_size), jnp.float32) * 0.02
    class_embedding = jax.random.normal(k3, (D,), jnp.float32)
    position_embedding = jax.random.normal(k4, (num_positions, D),
                                           jnp.float32) * 0.02

    out = clip_vision_embeddings(pixel_values, conv_weight, class_embedding,
                                 position_embedding, patch_size=patch_size,
                                 out_dtype=jnp.float32)
    out = jax.block_until_ready(out)

    # Pure-JAX f32 reference matching the PyTorch module semantics.
    gh = image_size // patch_size
    xr = pixel_values.reshape(B, C, gh, patch_size, gh, patch_size)
    xr = xr.transpose(0, 2, 4, 1, 3, 5).reshape(B, num_patches, -1)
    wr = conv_weight.reshape(D, -1).T
    ref_patch = xr @ wr + position_embedding[1:][None]
    ref_cls = jnp.broadcast_to(
        (class_embedding + position_embedding[0])[None, None, :], (B, 1, D))
    ref = jnp.concatenate([ref_cls, ref_patch], axis=1)

    assert out.shape == (B, num_positions, D), out.shape
    max_err = float(jnp.max(jnp.abs(out - ref)))
    assert max_err < 5e-2, f"max abs error {max_err}"
    print("KERNEL_OK")
</pallas_src>

<mosaic_0001>
module attributes {stable_mosaic.version = 11 : i64} {
  func.func @_patch_embed_kernel(%arg0: i32, %arg1: memref<1x17x256xbf16, #tpu.memory_space<vmem>>, %arg2: memref<256x128xbf16, #tpu.memory_space<vmem>>, %arg3: memref<17x128xf32, #tpu.memory_space<vmem>>, %arg4: memref<1x17x128xf32, #tpu.memory_space<vmem>>) attributes {dimension_semantics = [#tpu.dimension_semantics<parallel>], iteration_bounds = array<i64: 2>, scalar_prefetch = 0 : i64, scratch_operands = 0 : i64, tpu.core_type = #tpu.core_type<tc>, window_params = [{transform_indices = @transform_0, window_bounds = array<i64: 1, 17, 256>}, {pipeline_mode = #tpu.pipeline_mode<synchronous>, transform_indices = @transform_1, window_bounds = array<i64: 256, 128>}, {pipeline_mode = #tpu.pipeline_mode<synchronous>, transform_indices = @transform_2, window_bounds = array<i64: 17, 128>}, {transform_indices = @transform_3, window_bounds = array<i64: 1, 17, 128>}]} {
    %c0 = arith.constant 0 : index
    %c0_0 = arith.constant 0 : index
    %c0_1 = arith.constant 0 : index
    %0 = vector.load %arg1[%c0, %c0_0, %c0_1] : memref<1x17x256xbf16, #tpu.memory_space<vmem>>, vector<1x17x256xbf16>
    %1 = vector.shape_cast %0 : vector<1x17x256xbf16> to vector<17x256xbf16>
    %c0_2 = arith.constant 0 : index
    %c0_3 = arith.constant 0 : index
    %2 = vector.load %arg2[%c0_2, %c0_3] : memref<256x128xbf16, #tpu.memory_space<vmem>>, vector<256x128xbf16>
    %cst = arith.constant dense<0.000000e+00> : vector<17x128xf32>
    %3 = tpu.matmul %1, %2, %cst {dimension_numbers = #tpu.dot_dimension_numbers<[1], [0], [0], [1], [0, 0, 1, 1], [], []>} : vector<17x256xbf16>, vector<256x128xbf16>, vector<17x128xf32> -> vector<17x128xf32>
    %c0_4 = arith.constant 0 : index
    %c0_5 = arith.constant 0 : index
    %4 = vector.load %arg3[%c0_4, %c0_5] : memref<17x128xf32, #tpu.memory_space<vmem>>, vector<17x128xf32>
    %5 = arith.addf %3, %4 : vector<17x128xf32>
    %c0_6 = arith.constant 0 : index
    %c0_7 = arith.constant 0 : index
    %c0_8 = arith.constant 0 : index
    %6 = vector.load %arg4[%c0_6, %c0_7, %c0_8] : memref<1x17x128xf32, #tpu.memory_space<vmem>>, vector<1x17x128xf32>
    %7 = vector.shape_cast %6 : vector<1x17x128xf32> to vector<17x128xf32>
    %8 = vector.shape_cast %5 : vector<17x128xf32> to vector<1x17x128xf32>
    tpu.vector_store %arg4[%c0_6, %c0_7, %c0_8], %8 {strides = array<i32>} : memref<1x17x128xf32, #tpu.memory_space<vmem>>, vector<1x17x128xf32>,
    return
  }
  func.func @transform_0(%arg0: i32) -> (i32, i32, i32) {
    %c0_i32 = arith.constant 0 : i32
    %c0_i32_0 = arith.constant 0 : i32
    %c0_i32_1 = arith.constant 0 : i32
    return %arg0, %c0_i32, %c0_i32_0 : i32, i32, i32
  }
  func.func @transform_1(%arg0: i32) -> (i32, i32) {
    %c0_i32 = arith.constant 0 : i32
    %c0_i32_0 = arith.constant 0 : i32
    %c0_i32_1 = arith.constant 0 : i32
    return %c0_i32, %c0_i32_0 : i32, i32
  }
  func.func @transform_2(%arg0: i32) -> (i32, i32) {
    %c0_i32 = arith.constant 0 : i32
    %c0_i32_0 = arith.constant 0 : i32
    %c0_i32_1 = arith.constant 0 : i32
    return %c0_i32, %c0_i32_0 : i32, i32
  }
  func.func @transform_3(%arg0: i32) -> (i32, i32, i32) {
    %c0_i32 = arith.constant 0 : i32
    %c0_i32_0 = arith.constant 0 : i32
    %c0_i32_1 = arith.constant 0 : i32
    return %arg0, %c0_i32, %c0_i32_0 : i32, i32, i32
  }
}

</mosaic_0001>

<llo_original>
// kernel: tpu_custom_call.1
$region0: #{tpu_custom_call.1}
  #allocation0 [shape = 'u32[]', space=smem, size = 0x4, offset = 0x4, fixed_abs, tag = 'smem constant byte address 0x4 - core index']
  #allocation1 [shape = 'u32[144,128]{1,0:T(1,128)}', space=vmem, size = 0x12000, scoped, tag = 'internal scratch']
  %s0 = inlined_call_operand.vmem [shape: bf16[2,17,256], index: 0, kind: input, shape index: {}]
  %s1 = inlined_call_operand.hbm [shape: bf16[256,128], index: 1, kind: input, shape index: {}]
  %s2 = inlined_call_operand.vmem [shape: f32[17,128], index: 2, kind: input, shape index: {}]
  %s3 = inlined_call_operand.vmem [shape: f32[2,17,128], index: 3, kind: output, shape index: {}]
  %s4 = sld [smem:[#allocation0]]
  $region49: #{tpu_custom_call.1} parent=0
    _
  %s6 = ssub.s32 1, %s4
  %s7 = scalar_select 0, %s6, %s4
  $region1: #{tpu_custom_call.1} parent=0
    #allocation2 [shape = 'u8[65536]{0}', space=vmem, size = 0x10000, scoped, tag = 'input window, operand 1, single buffered']
    #allocation3 [shape = 's32[2]{0}', space=sflag, size = 0x8, scoped, tag = 'scoped memory for tpu_custom_call.1']
    %8 = vsyncpa [#allocation3], 0
    loop: start=0, step=1, limit=4
    $region2: #{tpu_custom_call.1} parent=1 // loop_pre_header
      _
    $region3: #{tpu_custom_call.1} parent=1 // loop_header
      %s10 = sphi 0, %s14
      %p11 = scmp.ge.s32.totalorder %s10, 4
      %s20 = sphi 0, %s22
      %s23 = sphi 0, %s20
      %s24 = sphi 0, %s23
      %s40 = sphi 0, %s24
      %s44 = sphi 0, %s44
      %s46 = sphi 0, %s44
      %s47 = sphi 0, %s46
      %s61 = sphi 0, %s47
      %s65 = sphi 0, %s65
      %s67 = sphi 0, %s65
      %s68 = sphi 0, %s67
      %s82 = sphi 0, %s68
      %s88 = sphi 0, %s90
      %s91 = sphi 0, %s88
      %s92 = sphi 0, %s91
      %s108 = sphi 0, %s92
    $region4: #{tpu_custom_call.1} parent=1 // loop_header_branch
      %13 = sbr.rel (%p11) target = $region8
    $region5: #{tpu_custom_call.1} parent=1 // loop_body
      %s15 = ssub.s32 %s10, 1
      %s16 = ssub.s32 %s10, 2
      %s17 = sadd.s32 %s10, 1
      %s18 = ssub.s32 %s10, %s17
      %p19 = scmp.eq.s32.totalorder %s18, 0
      %s21 = sadd.s32 %s20, 1
      %s22 = scalar_select %p19, %s20, %s21
      %p25 = pneg %p19
      %p26 = scmp.eq.s32.totalorder %s10, 1
      %p27 = por %p25, %p26
      %p28 = scmp.ne.s32.totalorder %s20, %s23
      %p29 = scmp.eq.s32.totalorder %s10, 0
      %p30 = por %p28, %p29
      %p31 = scmp.ne.s32.totalorder %s20, %s23
      %p32 = scmp.eq.s32.totalorder %s15, 1
      %p33 = por %p31, %p32
      %p34 = scmp.ne.s32.totalorder %s23, %s24
      %p35 = scmp.eq.s32.totalorder %s15, 0
      %p36 = por %p34, %p35
      %p37 = scmp.ne.s32.totalorder %s23, %s24
      %p38 = scmp.eq.s32.totalorder %s16, 1
      %p39 = por %p37, %p38
      %p41 = scmp.ne.s32.totalorder %s24, %s40
      %p42 = scmp.eq.s32.totalorder %s16, 0
      %p43 = por %p41, %p42
      %s45 = sadd.s32 %s44, 1
      %p48 = scmp.eq.s32.totalorder %s10, 1
      %p49 = scmp.ne.s32.totalorder %s44, %s46
      %p50 = scmp.eq.s32.totalorder %s10, 0
      %p51 = por %p49, %p50
      %p52 = scmp.ne.s32.totalorder %s44, %s46
      %p53 = scmp.eq.s32.totalorder %s15, 1
      %p54 = por %p52, %p53
      %p55 = scmp.ne.s32.totalorder %s46, %s47
      %p56 = scmp.eq.s32.totalorder %s15, 0
      %p57 = por %p55, %p56
      %p58 = scmp.ne.s32.totalorder %s46, %s47
      %p59 = scmp.eq.s32.totalorder %s16, 1
      %p60 = por %p58, %p59
      %p62 = scmp.ne.s32.totalorder %s47, %s61
      %p63 = scmp.eq.s32.totalorder %s16, 0
      %p64 = por %p62, %p63
      %s66 = sadd.s32 %s65, 1
      %p69 = scmp.eq.s32.totalorder %s10, 1
      %p70 = scmp.ne.s32.totalorder %s65, %s67
      %p71 = scmp.eq.s32.totalorder %s10, 0
      %p72 = por %p70, %p71
      %p73 = scmp.ne.s32.totalorder %s65, %s67
      %p74 = scmp.eq.s32.totalorder %s15, 1
      %p75 = por %p73, %p74
      %p76 = scmp.ne.s32.totalorder %s67, %s68
      %p77 = scmp.eq.s32.totalorder %s15, 0
      %p78 = por %p76, %p77
      %p79 = scmp.ne.s32.totalorder %s67, %s68
      %p80 = scmp.eq.s32.totalorder %s16, 1
      %p81 = por %p79, %p80
      %p83 = scmp.ne.s32.totalorder %s68, %s82
      %p84 = scmp.eq.s32.totalorder %s16, 0
      %p85 = por %p83, %p84
      %s86 = ssub.s32 %s10, %s17
      %p87 = scmp.eq.s32.totalorder %s86, 0
      %s89 = sadd.s32 %s88, 1
      %s90 = scalar_select %p87, %s88, %s89
      %p93 = pneg %p87
      %p94 = scmp.eq.s32.totalorder %s10, 1
      %p95 = por %p93, %p94
      %p96 = scmp.ne.s32.totalorder %s88, %s91
      %p97 = scmp.eq.s32.totalorder %s10, 0
      %p98 = por %p96, %p97
      %p99 = scmp.ne.s32.totalorder %s88, %s91
      %p100 = scmp.eq.s32.totalorder %s15, 1
      %p101 = por %p99, %p100
      %p102 = scmp.ne.s32.totalorder %s91, %s92
      %p103 = scmp.eq.s32.totalorder %s15, 0
      %p104 = por %p102, %p103
      %p105 = scmp.ne.s32.totalorder %s91, %s92
      %p106 = scmp.eq.s32.totalorder %s16, 1
      %p107 = por %p105, %p106
      %p109 = scmp.ne.s32.totalorder %s92, %s108
      %p110 = scmp.eq.s32.totalorder %s16, 0
      %p111 = por %p109, %p110
      %p112 = scmp.le.s32.totalorder 1, %s10
      %p113 = scmp.lt.s32.totalorder %s10, 3
      %p114 = pnand %p112, %p113
      %p115 = pneg %p114
      // Predicated region
      $region9: #{tpu_custom_call.1} parent=5 // pred_check
        _
      $region10: #{tpu_custom_call.1} parent=5 // pred_check_branch
        %117 = sbr.rel (%p114) target = $region12
      $region11: #{tpu_custom_call.1} parent=5 // pred_region
        %s118 = ssub.s32 %s10, 1
        // Predicated region
        $region13: #{tpu_custom_call.1} parent=11 // pred_check
          %p119 = pneg %p57
        $region14: #{tpu_custom_call.1} parent=11 // pred_check_branch
          %121 = sbr.rel (%p119) target = $region16
        $region15: #{tpu_custom_call.1} parent=11 // pred_region
          %s123 = ssub.s32 2048, 2048
          %124 = vsyncadd [#allocation3], %s123
          %s125 = sshll.u32 [#allocation2], 4
          %s126 = int_to_ptr.vmem [resolvable:$true] %s125
          %131 = dma.hbm_to_vmem [thread:$0]  %s1, 2048, %s126, [#allocation3], 64, 64, 4
        $region16: #{tpu_custom_call.1} parent=11 // pred_fallthru
          _
        // Predicated region
        $region17: #{tpu_custom_call.1} parent=11 // pred_check
          %p132 = pneg %p78
        $region18: #{tpu_custom_call.1} parent=11 // pred_check_branch
          %134 = sbr.rel (%p132) target = $region20
        $region19: #{tpu_custom_call.1} parent=11 // pred_region
          _
        $region20: #{tpu_custom_call.1} parent=11 // pred_fallthru
          _
      $region12: #{tpu_custom_call.1} parent=5 // pred_fallthru
        _
      %p135 = scmp.lt.s32.totalorder %s10, 2
      // Predicated region
      $region21: #{tpu_custom_call.1} parent=5 // pred_check
        %p136 = pneg %p135
      $region22: #{tpu_custom_call.1} parent=5 // pred_check_branch
        %138 = sbr.rel (%p136) target = $region24
      $region23: #{tpu_custom_call.1} parent=5 // pred_region
        // Predicated region
        $region25: #{tpu_custom_call.1} parent=23 // pred_check
          %p139 = pneg %p30
        $region26: #{tpu_custom_call.1} parent=23 // pred_check_branch
          %141 = sbr.rel (%p139) target = $region28
        $region27: #{tpu_custom_call.1} parent=23 // pred_region
          %p142 = scmp.lt.s32.totalorder %s10, 1
          %s143 = scalar_select %p142, %s10, 1
          %s144 = smul.addr %s143, 6
          %s145 = smul.addr %s144, 4
          %s146 = scalar_lea.vmem %s0, %s145
        $region28: #{tpu_custom_call.1} parent=23 // pred_fallthru
          _
      $region24: #{tpu_custom_call.1} parent=5 // pred_fallthru
        _
      %p147 = scmp.le.s32.totalorder 1, %s10
      %p148 = scmp.lt.s32.totalorder %s10, 3
      %p149 = pnand %p147, %p148
      %p150 = pneg %p149
      // Predicated region
      $region29: #{tpu_custom_call.1} parent=5 // pred_check
        _
      $region30: #{tpu_custom_call.1} parent=5 // pred_check_branch
        %152 = sbr.rel (%p149) target = $region32
      $region31: #{tpu_custom_call.1} parent=5 // pred_region
        %s153 = ssub.s32 %s10, 1
        // Predicated region
        $region33: #{tpu_custom_call.1} parent=31 // pred_check
          %p154 = pneg %p57
        $region34: #{tpu_custom_call.1} parent=31 // pred_check_branch
          %156 = sbr.rel (%p154) target = $region36
        $region35: #{tpu_custom_call.1} parent=31 // pred_region
          %157 = dma.done [#allocation3], 2048
        $region36: #{tpu_custom_call.1} parent=31 // pred_fallthru
          _
        %p158 = scmp.lt.s32.totalorder %s15, 1
        %s159 = scalar_select %p158, %s15, 1
        %s160 = smul.addr %s159, 6
        %s161 = smul.addr %s160, 4
        %s162 = scalar_lea.vmem %s0, %s161
        %p163 = pneg %p36
        %p164 = pneg %p33
        %p165 = pneg %p57
        %p166 = pneg %p54
        %p167 = pneg %p78
        %p168 = pneg %p75
        %p169 = pneg %p104
        %p170 = pneg %p101
        %p171 = scmp.lt.s32.totalorder %s15, 1
        %s172 = scalar_select %p171, %s15, 1
        %s173 = smul.addr %s172, 3
        %s174 = smul.addr %s173, 8
        %s175 = scalar_lea.vmem %s3, %s174
        %p176 = scmp.lt.s32.totalorder %s15, 1
        %s177 = scalar_select %p176, %s15, 1
        %s178 = smul.addr %s177, 6
        %s179 = smul.addr %s178, 4
        %s180 = scalar_lea.vmem %s0, %s179
        %p181 = scmp.lt.s32.totalorder %s15, 1
        %s182 = scalar_select %p181, %s15, 1
        %s183 = smul.addr %s182, 3
        %s184 = smul.addr %s183, 8
        %s185 = scalar_lea.vmem %s3, %s184
        %v187 = vld [vmem:[%s180] sm:$0xff]
        %v188 = vld [vmem:[%s180 + $0x8] sm:$0xff]
        %v189 = vld [vmem:[%s180 + $0x10] sm:$0x11]
        %v190 = vld [vmem:[#allocation2] sm:$0xf]
        %v191 = vld [vmem:[#allocation2 + $0x4] sm:$0xf]
        %v192 = vld [vmem:[#allocation2 + $0x8] sm:$0xf]
        %v193 = vld [vmem:[#allocation2 + $0xc] sm:$0xf]
        %v194 = vld [vmem:[#allocation2 + $0x10] sm:$0xf]
        %v195 = vld [vmem:[#allocation2 + $0x14] sm:$0xf]
        %v196 = vld [vmem:[#allocation2 + $0x18] sm:$0xf]
        %v197 = vld [vmem:[#allocation2 + $0x1c] sm:$0xf]
        %v198 = vld [vmem:[#allocation2 + $0x20] sm:$0xf]
        %v199 = vld [vmem:[#allocation2 + $0x24] sm:$0xf]
        %v200 = vld [vmem:[#allocation2 + $0x28] sm:$0xf]
        %v201 = vld [vmem:[#allocation2 + $0x2c] sm:$0xf]
        %v202 = vld [vmem:[#allocation2 + $0x30] sm:$0xf]
        %v203 = vld [vmem:[#allocation2 + $0x34] sm:$0xf]
        %v204 = vld [vmem:[#allocation2 + $0x38] sm:$0xf]
        %v205 = vld [vmem:[#allocation2 + $0x3c] sm:$0xf]
        %v206 = vld [vmem:[#allocation2 + $0x40] sm:$0xf]
        %v207 = vld [vmem:[#allocation2 + $0x44] sm:$0xf]
        %v208 = vld [vmem:[#allocation2 + $0x48] sm:$0xf]
        %v209 = vld [vmem:[#allocation2 + $0x4c] sm:$0xf]
        %v210 = vld [vmem:[#allocation2 + $0x50] sm:$0xf]
        %v211 = vld [vmem:[#allocation2 + $0x54] sm:$0xf]
        %v212 = vld [vmem:[#allocation2 + $0x58] sm:$0xf]
        %v213 = vld [vmem:[#allocation2 + $0x5c] sm:$0xf]
        %v214 = vld [vmem:[#allocation2 + $0x60] sm:$0xf]
        %v215 = vld [vmem:[#allocation2 + $0x64] sm:$0xf]
        %v216 = vld [vmem:[#allocation2 + $0x68] sm:$0xf]
        %v217 = vld [vmem:[#allocation2 + $0x6c] sm:$0xf]
        %v218 = vld [vmem:[#allocation2 + $0x70] sm:$0xf]
        %v219 = vld [vmem:[#allocation2 + $0x74] sm:$0xf]
        %v220 = vld [vmem:[#allocation2 + $0x78] sm:$0xf]
        %v221 = vld [vmem:[#allocation2 + $0x7c] sm:$0xf]
        %v222 = vld [vmem:[%s2] sm:$0xff]
        %v223 = vld [vmem:[%s2 + $0x8] sm:$0xff]
        %v224 = vld [vmem:[%s2 + $0x10] sm:$0x1]
        %v228 = vunpack.c.l.b16 %v187
        %v229 = vunpack.c.h.b16 %v187
        %v230 = vunpack.c.l.b16 %v188
        %v231 = vunpack.c.h.b16 %v188
        %v232 = vunpack.c.l.b16 %v189
        %v233 = vunpack.c.h.b16 %v189
        %v234 = vpack.c.b16 %v230, %v228
        %v235 = vpack.c.b16 %v231, %v229
        %v236 = vpack.c.b16 %v232, %v232
        %v237 = vpack.c.b16 %v233, %v233
        %v274 = vunpack.c.l.b16 %v190
        %v275 = vunpack.c.l.b16 %v191
        %v276 = vunpack.c.l.b16 %v192
        %v277 = vunpack.c.l.b16 %v193
        %v278 = vunpack.c.l.b16 %v194
        %v279 = vunpack.c.l.b16 %v195
        %v280 = vunpack.c.l.b16 %v196
        %v281 = vunpack.c.l.b16 %v197
        %v282 = vunpack.c.l.b16 %v198
        %v283 = vunpack.c.l.b16 %v199
        %v284 = vunpack.c.l.b16 %v200
        %v285 = vunpack.c.l.b16 %v201
        %v286 = vunpack.c.l.b16 %v202
        %v287 = vunpack.c.l.b16 %v203
        %v288 = vunpack.c.l.b16 %v204
        %v289 = vunpack.c.l.b16 %v205
        %v290 = vunpack.c.l.b16 %v206
        %v291 = vunpack.c.l.b16 %v207
        %v292 = vunpack.c.l.b16 %v208
        %v293 = vunpack.c.l.b16 %v209
        %v294 = vunpack.c.l.b16 %v210
        %v295 = vunpack.c.l.b16 %v211
        %v296 = vunpack.c.l.b16 %v212
        %v297 = vunpack.c.l.b16 %v213
        %v298 = vunpack.c.l.b16 %v214
        %v299 = vunpack.c.l.b16 %v215
        %v300 = vunpack.c.l.b16 %v216
        %v301 = vunpack.c.l.b16 %v217
        %v302 = vunpack.c.l.b16 %v218
        %v303 = vunpack.c.l.b16 %v219
        %v304 = vunpack.c.l.b16 %v220
        %v305 = vunpack.c.l.b16 %v221
        %v306 = vpack.c.b16 %v275, %v274
        %v307 = vpack.c.b16 %v277, %v276
        %v308 = vpack.c.b16 %v279, %v278
        %v309 = vpack.c.b16 %v281, %v280
        %v310 = vpack.c.b16 %v283, %v282
        %v311 = vpack.c.b16 %v285, %v284
        %v312 = vpack.c.b16 %v287, %v286
        %v313 = vpack.c.b16 %v289, %v288
        %v314 = vpack.c.b16 %v291, %v290
        %v315 = vpack.c.b16 %v293, %v292
        %v316 = vpack.c.b16 %v295, %v294
        %v317 = vpack.c.b16 %v297, %v296
        %v318 = vpack.c.b16 %v299, %v298
        %v319 = vpack.c.b16 %v301, %v300
        %v320 = vpack.c.b16 %v303, %v302
        %v321 = vpack.c.b16 %v305, %v304
        %338 = vmatprep.subr.bf16.mxu0 0
        %339 = vmatpush1.bf16.msra.mxu0 %v306
        %340 = vmatprep.subr.bf16.mxu0 0
        %341 = vmatpush1.bf16.msra.mxu0 %v307
        %342 = vmatprep.subr.bf16.mxu0 0
        %343 = vmatpush1.bf16.msra.mxu0 %v308
        %344 = vmatprep.subr.bf16.mxu0 0
        %345 = vmatpush1.bf16.msra.mxu0 %v309
        %346 = vmatprep.subr.bf16.mxu0 0
        %347 = vmatpush1.bf16.msra.mxu0 %v310
        %348 = vmatprep.subr.bf16.mxu0 0
        %349 = vmatpush1.bf16.msra.mxu0 %v311
        %350 = vmatprep.subr.bf16.mxu0 0
        %351 = vmatpush1.bf16.msra.mxu0 %v312
        %352 = vmatprep.subr.bf16.mxu0 0
        %353 = vmatpush1.bf16.msra.mxu0 %v313
        %354 = vmatprep.subr.bf16.mxu0 0
        %355 = vmatpush1.bf16.msra.mxu0 %v314
        %356 = vmatprep.subr.bf16.mxu0 0
        %357 = vmatpush1.bf16.msra.mxu0 %v315
        %358 = vmatprep.subr.bf16.mxu0 0
        %359 = vmatpush1.bf16.msra.mxu0 %v316
        %360 = vmatprep.subr.bf16.mxu0 0
        %361 = vmatpush1.bf16.msra.mxu0 %v317
        %362 = vmatprep.subr.bf16.mxu0 0
        %363 = vmatpush1.bf16.msra.mxu0 %v318
        %364 = vmatprep.subr.bf16.mxu0 0
        %365 = vmatpush1.bf16.msra.mxu0 %v319
        %366 = vmatprep.subr.bf16.mxu0 0
        %367 = vmatpush1.bf16.msra.mxu0 %v320
        %368 = vmatprep.subr.bf16.mxu0 0
        %369 = vmatpush1.bf16.msra.mxu0 %v321
        %370 = vmatprep.mubr.bf16.mxu0 %v235
        %371 = vmatmul.mubr.bf16.gmra.mrb[0].mxu0 %v234
        %v372 = vpop.f32.mrb[0].mxu0
        %v373 = vadd.f32 %v222, %v372
        %v374 = vpop.f32.mrb[0].mxu0
        %v375 = vpop.f32.mrb[0].mxu0
        %v376 = vadd.f32 %v223, %v375
        %v377 = vpop.f32.mrb[0].mxu0
        %378 = vmatprep.mubr.bf16.mxu0 %v237
        %379 = vmatmul.mubr.bf16.gmra.mrb[0].mxu0 %v236
        %v380 = vpop.f32.mrb[0].mxu0
        %v381 = vadd.f32 %v224, %v380
        %v382 = vpop.f32.mrb[0].mxu0
        %v383 = vpop.f32.mrb[0].mxu0
        %v384 = vpop.f32.mrb[0].mxu0
        %385 = vdwg.mxu0
        %386 = vst [vmem:[%s185] sm:$0xff] %v373
        %387 = vst [vmem:[%s185 + $0x8] sm:$0xff] %v376
        %388 = vst [vmem:[%s185 + $0x10] sm:$0x1] %v381
        %p389 = scmp.lt.s32.totalorder %s15, 1
        %s390 = scalar_select %p389, %s15, 1
        %s391 = smul.addr %s390, 3
        %s392 = smul.addr %s391, 8
        %s393 = scalar_lea.vmem %s3, %s392
        // Predicated region
        $region37: #{tpu_custom_call.1} parent=31 // pred_check
          %p394 = pneg %p101
        $region38: #{tpu_custom_call.1} parent=31 // pred_check_branch
          %396 = sbr.rel (%p394) target = $region40
        $region39: #{tpu_custom_call.1} parent=31 // pred_region
          _
        $region40: #{tpu_custom_call.1} parent=31 // pred_fallthru
          _
      $region32: #{tpu_custom_call.1} parent=5 // pred_fallthru
        _
      %p397 = scmp.le.s32.totalorder 2, %s10
      // Predicated region
      $region41: #{tpu_custom_call.1} parent=5 // pred_check
        %p398 = pneg %p397
      $region42: #{tpu_custom_call.1} parent=5 // pred_check_branch
        %400 = sbr.rel (%p398) target = $region44
      $region43: #{tpu_custom_call.1} parent=5 // pred_region
        %s401 = ssub.s32 %s10, 2
        // Predicated region
        $region45: #{tpu_custom_call.1} parent=43 // pred_check
          %p402 = pneg %p107
        $region46: #{tpu_custom_call.1} parent=43 // pred_check_branch
          %404 = sbr.rel (%p402) target = $region48
        $region47: #{tpu_custom_call.1} parent=43 // pred_region
          %p405 = scmp.lt.s32.totalorder %s16, 1
          %s406 = scalar_select %p405, %s16, 1
          %s407 = smul.addr %s406, 3
          %s408 = smul.addr %s407, 8
          %s409 = scalar_lea.vmem %s3, %s408
        $region48: #{tpu_custom_call.1} parent=43 // pred_fallthru
          _
      $region44: #{tpu_custom_call.1} parent=5 // pred_fallthru
        _
    $region6: #{tpu_custom_call.1} parent=1 // loop_footer
      %s14 = sadd.s32 1, %s10
    $region7: #{tpu_custom_call.1} parent=1 // loop_footer_branch
      %9 = sbr.rel target = $region3
    $region8: #{tpu_custom_call.1} parent=1 // loop_exit
      _
    %410 = vsyncpa [#allocation3], 1
    %s411 = scalar_lea.sflag [#allocation3], 1
    %412 = vsyncpa %s411, 1

</llo_original>
